<compile_context>
chip_gen: v6e
topology: v6e:2x2x1
jax: 0.10.0
libtpu: 0.0.40
codegen_flags: <defaults>
</compile_context>

<pallas_src>
import math

import jax
import jax.numpy as jnp
from jax.experimental import pallas as pl
from jax.experimental.pallas import tpu as pltpu


def _cen_kernel(ctx_ref, x_ref, p_ref, o_ref):
    """One grid step = one (tR, L) row tile of one batch element.

    ctx_ref : SMEM (B,) int32 -- scalar-prefetched context ids (only consumed
                                 by the BlockSpec index_maps)
    x_ref   : VMEM (tR, L)
    p_ref   : VMEM (2, L)     -- row 0: context mean, row 1: 1/(exp(std)+eps)
    o_ref   : VMEM (tR, L)
    """
    del ctx_ref
    x = x_ref[...]
    mean = p_ref[0:1, :]       # (1, L), sublane-broadcast over tR rows
    inv_std = p_ref[1:2, :]    # (1, L)
    o_ref[...] = ((x - mean) * inv_std).astype(o_ref.dtype)


def _sublane_multiple(itemsize):
    # f32 -> 8, bf16 -> 16, int8/fp8 -> 32 sublanes per packed tile row.
    return 8 * max(1, 4 // int(itemsize))


def _fold_factor(D, S):
    """Sequence positions folded into the lane axis so the kernel's last dim
    is a multiple of 128 (unmasked stores), widened toward 512 lanes when the
    sequence is long enough."""
    if D % 128 == 0:
        f = 1
    else:
        f = 128 // math.gcd(D, 128)       # smallest f with (f*D) % 128 == 0
        # Pathological tiny-S / huge-fold case: padding S up to a multiple of
        # f would more than double HBM traffic, which is worse than the
        # masked-store penalty — only then fall back to no fold.
        if ((S + f - 1) // f) * f > 2 * S:
            return 1
    # Widen toward 512 lanes (longer unmasked vst runs, fewer per-row
    # bookkeeping bundles) only when plenty of rows remain for multi-step
    # pipelining / 2-TC sharding and the widening adds no padding.
    while f * D < 512 and S >= 128 * f and S % (2 * f) == 0:
        f *= 2
    return f


def _vmem_budget_and_limit():
    """Generation-aware (x+out double-buffer tile budget, vmem_limit_bytes)."""
    mib = 1 << 20
    kind = ""
    try:
        kind = jax.devices()[0].device_kind.lower()
    except Exception:
        pass
    vmem_cap = None
    try:
        vmem_cap = int(pltpu.get_tpu_info().vmem_capacity_bytes)
    except Exception:
        vmem_cap = None
    if (vmem_cap is not None and vmem_cap <= 64 * mib) or "v7" in kind:
        # v7x-class: only 64 MiB physical VMEM per TensorCore -- leave headroom.
        return 20 * mib, 28 * mib
    if "v6" in kind:
        return 24 * mib, 32 * mib
    if "v4" in kind or "v5p" in kind:
        return 24 * mib, 32 * mib
    # v5e / unknown: stay at-or-under the 16 MiB default scoped limit, but set
    # it explicitly so future budget bumps never silently fail to compile.
    return 12 * mib, 16 * mib


def _choose_row_tile(rows, lane, itemsize, budget_bytes, min_tiles=8):
    """Row tile that (a) fits the double-buffered x+out VMEM budget and
    (b) yields >= min_tiles pipeline steps per batch element when rows permit,
    so DMA prefetch/writeback overlap works and v7x can shard across 2 TCs."""
    sub = _sublane_multiple(itemsize)
    if rows <= sub:
        return rows                                     # full extent
    # Largest tile fitting the budget: x + out, each double-buffered.
    max_rows = (budget_bytes // (4 * lane * int(itemsize))) // sub * sub
    max_rows = max(sub, max_rows)
    # Cap so each batch element produces >= min_tiles grid steps.
    split_cap = max(sub, (rows // min_tiles) // sub * sub)
    return int(min(max_rows, split_cap))


def context_extended_norm(x, context_id, initial_mean, initial_std, epsilon=1e-3):
    """Pallas implementation of ContextExtendedNorm.forward((x, context_id))."""
    B, S, D = x.shape
    C = initial_mean.shape[0]

    context_id = context_id.astype(jnp.int32)

    # Hoist exp + reciprocal out of the kernel (tiny (C, D) op in the wrapper).
    mean = initial_mean.astype(jnp.float32)
    inv_std = 1.0 / (jnp.exp(initial_std.astype(jnp.float32)) + epsilon)   # (C, D)

    # Lane-dense fold: last dim L = f*D; pad S up to a multiple of f rather
    # than ever presenting a sub-128 lane width (masked-store cliff).
    f = _fold_factor(D, S)
    S_pad = ((S + f - 1) // f) * f
    x_p = jnp.pad(x, ((0, 0), (0, S_pad - S), (0, 0))) if S_pad != S else x
    L = f * D
    rows = S_pad // f
    x_r = x_p.reshape(B, rows, L)                         # free, contiguous

    # Single fused (C, 2, L) parameter slab: row 0 = mean, row 1 = inv_std.
    mean_r = jnp.tile(mean, (1, f))                       # (C, L), tiny
    inv_r = jnp.tile(inv_std, (1, f))                     # (C, L), tiny
    params = jnp.stack([mean_r, inv_r], axis=1)           # (C, 2, L)

    itemsize = jnp.dtype(x.dtype).itemsize
    budget, vmem_limit = _vmem_budget_and_limit()
    tR = _choose_row_tile(rows, L, itemsize, budget)
    grid = (B, pl.cdiv(rows, tR))

    cost = pl.CostEstimate(
        flops=2 * B * rows * L,                           # one sub + one mul per element
        transcendentals=0,
        bytes_accessed=2 * B * rows * L * int(itemsize) + B * 2 * L * 4,
    )

    out = pl.pallas_call(
        _cen_kernel,
        out_shape=jax.ShapeDtypeStruct((B, rows, L), x.dtype),
        grid_spec=pltpu.PrefetchScalarGridSpec(
            num_scalar_prefetch=1,                        # context_id -> SMEM
            grid=grid,
            in_specs=[
                # x: one (tR, L) tile per grid step (batch dim squeezed).
                pl.BlockSpec((pl.Squeezed(), tR, L), lambda b, s, ctx: (b, s, 0)),
                # Fused param slab gathered by the scalar-prefetched context id.
                pl.BlockSpec((pl.Squeezed(), 2, L), lambda b, s, ctx: (ctx[b], 0, 0)),
            ],
            out_specs=pl.BlockSpec((pl.Squeezed(), tR, L), lambda b, s, ctx: (b, s, 0)),
        ),
        compiler_params=pltpu.CompilerParams(
            dimension_semantics=("parallel", "parallel"),
            vmem_limit_bytes=vmem_limit,
        ),
        cost_estimate=cost,
    )(context_id, x_r, params)

    out = out.reshape(B, S_pad, D)
    if S_pad != S:
        out = out[:, :S, :]
    return out


def _xavier_uniform(key, shape, dtype=jnp.float32):
    # torch.nn.init.xavier_uniform_ on a (num_contexts, input_dim) tensor:
    # fan_in = input_dim, fan_out = num_contexts, bound = sqrt(6/(fan_in+fan_out))
    fan_out, fan_in = shape
    bound = (6.0 / (fan_in + fan_out)) ** 0.5
    return jax.random.uniform(key, shape, dtype=dtype, minval=-bound, maxval=bound)


def _reference(x, context_id, mean, std, epsilon=1e-3):
    m = mean[context_id][:, None, :]               # (B, 1, D)
    s = jnp.exp(std[context_id])[:, None, :]       # (B, 1, D)
    return (x - m) / (s + epsilon)


if __name__ == "__main__":
    key = jax.random.PRNGKey(0)
    k_mean, k_std, k_x, k_ctx, k_x2, k_ctx2 = jax.random.split(key, 6)

    num_contexts = 4
    input_dim = 32
    batch = 2
    seq = 8

    initial_mean = _xavier_uniform(k_mean, (num_contexts, input_dim))
    initial_std = _xavier_uniform(k_std, (num_contexts, input_dim))

    # Case 1: the module's demo-sized shapes.
    x = jax.random.normal(k_x, (batch, seq, input_dim), dtype=jnp.float32)
    context_id = jax.random.randint(
        k_ctx, (batch,), minval=0, maxval=num_contexts, dtype=jnp.int32
    )
    out = context_extended_norm(x, context_id, initial_mean, initial_std, epsilon=1e-3)
    out = jax.block_until_ready(out)
    ref = _reference(x, context_id, initial_mean, initial_std, epsilon=1e-3)
    assert out.shape == x.shape
    assert jnp.allclose(out, ref, atol=1e-5, rtol=1e-5), "mismatch vs reference (small)"

    # Case 2: a longer sequence that exercises the multi-tile pipelined path.
    x2 = jax.random.normal(k_x2, (batch, 256, input_dim), dtype=jnp.float32)
    context_id2 = jax.random.randint(
        k_ctx2, (batch,), minval=0, maxval=num_contexts, dtype=jnp.int32
    )
    out2 = context_extended_norm(x2, context_id2, initial_mean, initial_std, epsilon=1e-3)
    out2 = jax.block_until_ready(out2)
    ref2 = _reference(x2, context_id2, initial_mean, initial_std, epsilon=1e-3)
    assert out2.shape == x2.shape
    assert jnp.allclose(out2, ref2, atol=1e-5, rtol=1e-5), "mismatch vs reference (tiled)"

    print("KERNEL_OK")
</pallas_src>

<mosaic_0001>
module attributes {stable_mosaic.version = 11 : i64} {
  func.func @_cen_kernel(%arg0: i32, %arg1: i32, %arg2: memref<2xi32, #tpu.memory_space<smem>>, %arg3: memref<1x2x128xf32, #tpu.memory_space<vmem>>, %arg4: memref<1x2x128xf32, #tpu.memory_space<vmem>>, %arg5: memref<1x2x128xf32, #tpu.memory_space<vmem>>) attributes {dimension_semantics = [#tpu.dimension_semantics<parallel>, #tpu.dimension_semantics<parallel>], iteration_bounds = array<i64: 2, 1>, scalar_prefetch = 1 : i64, scratch_operands = 0 : i64, tpu.core_type = #tpu.core_type<tc>, window_params = [{transform_indices = @transform_0, window_bounds = array<i64: 1, 2, 128>}, {transform_indices = @transform_1, window_bounds = array<i64: 1, 2, 128>}, {transform_indices = @transform_2, window_bounds = array<i64: 1, 2, 128>}]} {
    %c0 = arith.constant 0 : index
    %c0_0 = arith.constant 0 : index
    %c0_1 = arith.constant 0 : index
    %0 = vector.load %arg3[%c0, %c0_0, %c0_1] : memref<1x2x128xf32, #tpu.memory_space<vmem>>, vector<1x2x128xf32>
    %1 = vector.shape_cast %0 : vector<1x2x128xf32> to vector<2x128xf32>
    %c0_2 = arith.constant 0 : index
    %c0_3 = arith.constant 0 : index
    %c0_4 = arith.constant 0 : index
    %2 = vector.load %arg4[%c0_2, %c0_3, %c0_4] : memref<1x2x128xf32, #tpu.memory_space<vmem>>, vector<1x1x128xf32>
    %3 = vector.shape_cast %2 : vector<1x1x128xf32> to vector<1x128xf32>
    %c0_5 = arith.constant 0 : index
    %c1 = arith.constant 1 : index
    %c0_6 = arith.constant 0 : index
    %4 = vector.load %arg4[%c0_5, %c1, %c0_6] : memref<1x2x128xf32, #tpu.memory_space<vmem>>, vector<1x1x128xf32>
    %5 = vector.shape_cast %4 : vector<1x1x128xf32> to vector<1x128xf32>
    %6 = vector.broadcast %3 : vector<1x128xf32> to vector<2x128xf32>
    %7 = arith.subf %1, %6 : vector<2x128xf32>
    %8 = vector.broadcast %5 : vector<1x128xf32> to vector<2x128xf32>
    %9 = arith.mulf %7, %8 : vector<2x128xf32>
    %c0_7 = arith.constant 0 : index
    %c0_8 = arith.constant 0 : index
    %c0_9 = arith.constant 0 : index
    %10 = vector.load %arg5[%c0_7, %c0_8, %c0_9] : memref<1x2x128xf32, #tpu.memory_space<vmem>>, vector<1x2x128xf32>
    %11 = vector.shape_cast %10 : vector<1x2x128xf32> to vector<2x128xf32>
    %12 = vector.shape_cast %9 : vector<2x128xf32> to vector<1x2x128xf32>
    tpu.vector_store %arg5[%c0_7, %c0_8, %c0_9], %12 {strides = array<i32>} : memref<1x2x128xf32, #tpu.memory_space<vmem>>, vector<1x2x128xf32>,
    return
  }
  func.func @transform_0(%arg0: i32, %arg1: i32, %arg2: memref<2xi32, #tpu.memory_space<smem>>) -> (i32, i32, i32) {
    %c0_i32 = arith.constant 0 : i32
    %c0_i32_0 = arith.constant 0 : i32
    return %arg0, %arg1, %c0_i32 : i32, i32, i32
  }
  func.func @transform_1(%arg0: i32, %arg1: i32, %arg2: memref<2xi32, #tpu.memory_space<smem>>) -> (i32, i32, i32) {
    %0 = arith.index_cast %arg0 : i32 to index
    %1 = memref.load %arg2[%0] : memref<2xi32, #tpu.memory_space<smem>>
    %c0_i32 = arith.constant 0 : i32
    %c0_i32_0 = arith.constant 0 : i32
    %c0_i32_1 = arith.constant 0 : i32
    return %1, %c0_i32, %c0_i32_0 : i32, i32, i32
  }
  func.func @transform_2(%arg0: i32, %arg1: i32, %arg2: memref<2xi32, #tpu.memory_space<smem>>) -> (i32, i32, i32) {
    %c0_i32 = arith.constant 0 : i32
    %c0_i32_0 = arith.constant 0 : i32
    return %arg0, %arg1, %c0_i32 : i32, i32, i32
  }
}

</mosaic_0001>

<llo_original>
// kernel: tpu_custom_call.1
$region0: #{tpu_custom_call.1}
  #allocation0 [shape = 'u32[]', space=smem, size = 0x4, offset = 0x4, fixed_abs, tag = 'smem constant byte address 0x4 - core index']
  #allocation1 [shape = 'u32[144,128]{1,0:T(1,128)}', space=vmem, size = 0x12000, scoped, tag = 'internal scratch']
  #allocation2 [shape = 's32[1]{0}', space=sflag, size = 0x4, scoped, tag = 'scoped memory for tpu_custom_call.1']
  #allocation3 [shape = 'u8[512]{0}', space=smem, size = 0x200, scoped, tag = 'prefetched SMEM operand 0']
  %s0 = inlined_call_operand.hbm [shape: s32[2], index: 0, kind: input, shape index: {}]
  %s1 = inlined_call_operand.hbm [shape: f32[2,2,128], index: 1, kind: input, shape index: {}]
  %s2 = inlined_call_operand.hbm [shape: f32[4,2,128], index: 2, kind: input, shape index: {}]
  %s3 = inlined_call_operand.hbm [shape: f32[2,2,128], index: 3, kind: output, shape index: {}]
  %s4 = sld [smem:[#allocation0]]
  $region49: #{tpu_custom_call.1} parent=0
    _
  %s6 = ssub.s32 1, %s4
  %s7 = scalar_select 0, %s6, %s4
  %9 = dma.hbm_to_smem %s0, 16, [#allocation3], [#allocation2]
  %10 = dma.done [#allocation2], 16
  %11 = sfence
  $region1: #{tpu_custom_call.1} parent=0
    #allocation4 [shape = 'u8[2048]{0}', space=vmem, size = 0x800, scoped, tag = 'input window, operand 1']
    #allocation5 [shape = 's32[2]{0}', space=sflag, size = 0x8, scoped, tag = 'scoped memory for tpu_custom_call.1']
    #allocation6 [shape = 's32[2]{0}', space=sflag, size = 0x8, scoped, tag = 'scoped memory for tpu_custom_call.1']
    #allocation7 [shape = 'u8[2048]{0}', space=vmem, size = 0x800, scoped, tag = 'input window, operand 2']
    #allocation8 [shape = 's32[2]{0}', space=sflag, size = 0x8, scoped, tag = 'scoped memory for tpu_custom_call.1']
    #allocation9 [shape = 'u8[2048]{0}', space=vmem, size = 0x800, scoped, tag = 'output window, operand 0']
    %12 = vsyncpa [#allocation5], 0
    %s13 = scalar_lea.sflag [#allocation5], 1
    %14 = vsyncpa %s13, 0
    %15 = vsyncpa [#allocation8], 0
    %s16 = scalar_lea.sflag [#allocation8], 1
    %17 = vsyncpa %s16, 0
    %18 = vsyncpa [#allocation6], 0
    %s19 = scalar_lea.sflag [#allocation6], 1
    %20 = vsyncpa %s19, 0
    loop: start=0, step=1, limit=4
    $region2: #{tpu_custom_call.1} parent=1 // loop_pre_header
      _
    $region3: #{tpu_custom_call.1} parent=1 // loop_header
      %s22 = sphi 0, %s26
      %p23 = scmp.ge.s32.totalorder %s22, 4
      %s29 = sphi 0, %s41
      %s30 = sphi 0, %s37
      %s31 = sphi 0, %s29
      %s32 = sphi 0, %s30
      %s33 = sphi 0, %s31
      %s34 = sphi 0, %s32
      %s46 = sphi 0, %s48
      %s49 = sphi 0, %s46
      %s50 = sphi 0, %s49
      %s66 = sphi 0, %s50
      %s74 = sphi 0, %s76
      %s77 = sphi 0, %s74
      %s78 = sphi 0, %s77
      %s94 = sphi 0, %s78
      %s102 = sphi 0, %s104
      %s105 = sphi 0, %s102
      %s106 = sphi 0, %s105
      %s122 = sphi 0, %s106
    $region4: #{tpu_custom_call.1} parent=1 // loop_header_branch
      %25 = sbr.rel (%p23) target = $region8
    $region5: #{tpu_custom_call.1} parent=1 // loop_body
      %s27 = ssub.s32 %s22, 1
      %s28 = ssub.s32 %s22, 2
      %s35 = sadd.s32 1, %s30
      %p36 = scmp.ge.s32.totalorder %s35, 1
      %s37 = scalar_select %p36, 0, %s35
      %s38 = sadd.s32 1, %s29
      %s39 = scalar_select %p36, %s38, %s29
      %p40 = scmp.ge.s32.totalorder %s39, 2
      %s41 = scalar_select %p40, 0, %s39
      %s42 = ssub.s32 %s29, %s41
      %s43 = ssub.s32 %s30, %s37
      %s44 = sor.u32 %s42, %s43
      %p45 = scmp.eq.s32.totalorder %s44, 0
      %s47 = sadd.s32 %s46, 1
      %s48 = scalar_select %p45, %s46, %s47
      %p51 = pneg %p45
      %p52 = scmp.eq.s32.totalorder %s22, 1
      %p53 = por %p51, %p52
      %p54 = scmp.ne.s32.totalorder %s46, %s49
      %p55 = scmp.eq.s32.totalorder %s22, 0
      %p56 = por %p54, %p55
      %p57 = scmp.ne.s32.totalorder %s46, %s49
      %p58 = scmp.eq.s32.totalorder %s27, 1
      %p59 = por %p57, %p58
      %p60 = scmp.ne.s32.totalorder %s49, %s50
      %p61 = scmp.eq.s32.totalorder %s27, 0
      %p62 = por %p60, %p61
      %p63 = scmp.ne.s32.totalorder %s49, %s50
      %p64 = scmp.eq.s32.totalorder %s28, 1
      %p65 = por %p63, %p64
      %p67 = scmp.ne.s32.totalorder %s50, %s66
      %p68 = scmp.eq.s32.totalorder %s28, 0
      %p69 = por %p67, %p68
      %s70 = sld [smem:[#allocation3 + %s29]]
      %s71 = sld [smem:[#allocation3 + %s41]]
      %s72 = ssub.s32 %s70, %s71
      %p73 = scmp.eq.s32.totalorder %s72, 0
      %s75 = sadd.s32 %s74, 1
      %s76 = scalar_select %p73, %s74, %s75
      %p79 = pneg %p73
      %p80 = scmp.eq.s32.totalorder %s22, 1
      %p81 = por %p79, %p80
      %p82 = scmp.ne.s32.totalorder %s74, %s77
      %p83 = scmp.eq.s32.totalorder %s22, 0
      %p84 = por %p82, %p83
      %p85 = scmp.ne.s32.totalorder %s74, %s77
      %p86 = scmp.eq.s32.totalorder %s27, 1
      %p87 = por %p85, %p86
      %p88 = scmp.ne.s32.totalorder %s77, %s78
      %p89 = scmp.eq.s32.totalorder %s27, 0
      %p90 = por %p88, %p89
      %p91 = scmp.ne.s32.totalorder %s77, %s78
      %p92 = scmp.eq.s32.totalorder %s28, 1
      %p93 = por %p91, %p92
      %p95 = scmp.ne.s32.totalorder %s78, %s94
      %p96 = scmp.eq.s32.totalorder %s28, 0
      %p97 = por %p95, %p96
      %s98 = ssub.s32 %s29, %s41
      %s99 = ssub.s32 %s30, %s37
      %s100 = sor.u32 %s98, %s99
      %p101 = scmp.eq.s32.totalorder %s100, 0
      %s103 = sadd.s32 %s102, 1
      %s104 = scalar_select %p101, %s102, %s103
      %p107 = pneg %p101
      %p108 = scmp.eq.s32.totalorder %s22, 1
      %p109 = por %p107, %p108
      %p110 = scmp.ne.s32.totalorder %s102, %s105
      %p111 = scmp.eq.s32.totalorder %s22, 0
      %p112 = por %p110, %p111
      %p113 = scmp.ne.s32.totalorder %s102, %s105
      %p114 = scmp.eq.s32.totalorder %s27, 1
      %p115 = por %p113, %p114
      %p116 = scmp.ne.s32.totalorder %s105, %s106
      %p117 = scmp.eq.s32.totalorder %s27, 0
      %p118 = por %p116, %p117
      %p119 = scmp.ne.s32.totalorder %s105, %s106
      %p120 = scmp.eq.s32.totalorder %s28, 1
      %p121 = por %p119, %p120
      %p123 = scmp.ne.s32.totalorder %s106, %s122
      %p124 = scmp.eq.s32.totalorder %s28, 0
      %p125 = por %p123, %p124
      %p126 = scmp.le.s32.totalorder 1, %s22
      %p127 = scmp.lt.s32.totalorder %s22, 3
      %p128 = pnand %p126, %p127
      %p129 = pneg %p128
      // Predicated region
      $region9: #{tpu_custom_call.1} parent=5 // pred_check
        _
      $region10: #{tpu_custom_call.1} parent=5 // pred_check_branch
        %131 = sbr.rel (%p128) target = $region12
      $region11: #{tpu_custom_call.1} parent=5 // pred_region
        %s132 = ssub.s32 %s22, 1
      $region12: #{tpu_custom_call.1} parent=5 // pred_fallthru
        _
      %p133 = scmp.lt.s32.totalorder %s22, 2
      // Predicated region
      $region13: #{tpu_custom_call.1} parent=5 // pred_check
        %p134 = pneg %p133
      $region14: #{tpu_custom_call.1} parent=5 // pred_check_branch
        %136 = sbr.rel (%p134) target = $region16
      $region15: #{tpu_custom_call.1} parent=5 // pred_region
        // Predicated region
        $region17: #{tpu_custom_call.1} parent=15 // pred_check
          %p137 = pneg %p56
        $region18: #{tpu_custom_call.1} parent=15 // pred_check_branch
          %139 = sbr.rel (%p137) target = $region20
        $region19: #{tpu_custom_call.1} parent=15 // pred_region
          %s140 = sand.u32 %s46, 1
          %s141 = scalar_lea.sflag [#allocation5], %s140
          %s142 = sand.u32 %s46, 1
          %s143 = smul.addr %s142, 2
          %s144 = scalar_lea.vmem [#allocation4], %s143
          %s146 = ssub.s32 32, 32
          %147 = vsyncadd %s141, %s146
          %s148 = sadd.s32 %s30, %s29
          %s149 = smul.addr %s148, 32
          %s150 = scalar_lea.hbm %s1, %s149
          %s152 = sshll.u32 %s144, 4
          %s153 = int_to_ptr.vmem [resolvable:$true] %s152
          %155 = dma.hbm_to_vmem [thread:$0]  %s150, 32, %s153, %s141
        $region20: #{tpu_custom_call.1} parent=15 // pred_fallthru
          _
        // Predicated region
        $region21: #{tpu_custom_call.1} parent=15 // pred_check
          %p156 = pneg %p84
        $region22: #{tpu_custom_call.1} parent=15 // pred_check_branch
          %158 = sbr.rel (%p156) target = $region24
        $region23: #{tpu_custom_call.1} parent=15 // pred_region
          %s159 = sand.u32 %s74, 1
          %s160 = scalar_lea.sflag [#allocation8], %s159
          %s161 = sand.u32 %s74, 1
          %s162 = smul.addr %s161, 2
          %s163 = scalar_lea.vmem [#allocation7], %s162
          %s164 = sld [smem:[#allocation3 + %s29]]
          %s166 = ssub.s32 32, 32
          %167 = vsyncadd %s160, %s166
          %s168 = smul.addr %s164, 32
          %s169 = scalar_lea.hbm %s2, %s168
          %s171 = sshll.u32 %s163, 4
          %s172 = int_to_ptr.vmem [resolvable:$true] %s171
          %174 = dma.hbm_to_vmem [thread:$0]  %s169, 32, %s172, %s160
        $region24: #{tpu_custom_call.1} parent=15 // pred_fallthru
          _
      $region16: #{tpu_custom_call.1} parent=5 // pred_fallthru
        _
      %p175 = scmp.le.s32.totalorder 1, %s22
      %p176 = scmp.lt.s32.totalorder %s22, 3
      %p177 = pnand %p175, %p176
      %p178 = pneg %p177
      // Predicated region
      $region25: #{tpu_custom_call.1} parent=5 // pred_check
        _
      $region26: #{tpu_custom_call.1} parent=5 // pred_check_branch
        %180 = sbr.rel (%p177) target = $region28
      $region27: #{tpu_custom_call.1} parent=5 // pred_region
        %s181 = ssub.s32 %s22, 1
        %s182 = sand.u32 %s49, 1
        %s183 = scalar_lea.sflag [#allocation5], %s182
        %s184 = sand.u32 %s49, 1
        %s185 = smul.addr %s184, 2
        %s186 = scalar_lea.vmem [#allocation4], %s185
        // Predicated region
        $region29: #{tpu_custom_call.1} parent=27 // pred_check
          %p187 = pneg %p62
        $region30: #{tpu_custom_call.1} parent=27 // pred_check_branch
          %189 = sbr.rel (%p187) target = $region32
        $region31: #{tpu_custom_call.1} parent=27 // pred_region
          %190 = dma.done %s183, 32
        $region32: #{tpu_custom_call.1} parent=27 // pred_fallthru
          _
        %s191 = sand.u32 %s77, 1
        %s192 = scalar_lea.sflag [#allocation8], %s191
        %s193 = sand.u32 %s77, 1
        %s194 = smul.addr %s193, 2
        %s195 = scalar_lea.vmem [#allocation7], %s194
        // Predicated region
        $region33: #{tpu_custom_call.1} parent=27 // pred_check
          %p196 = pneg %p90
        $region34: #{tpu_custom_call.1} parent=27 // pred_check_branch
          %198 = sbr.rel (%p196) target = $region36
        $region35: #{tpu_custom_call.1} parent=27 // pred_region
          %199 = dma.done %s192, 32
        $region36: #{tpu_custom_call.1} parent=27 // pred_fallthru
          _
        %s200 = sand.u32 %s49, 1
        %s201 = scalar_lea.sflag [#allocation5], %s200
        %s202 = sand.u32 %s49, 1
        %s203 = smul.addr %s202, 2
        %s204 = scalar_lea.vmem [#allocation4], %s203
        %p205 = pneg %p62
        %p206 = pneg %p59
        %s207 = sand.u32 %s77, 1
        %s208 = scalar_lea.sflag [#allocation8], %s207
        %s209 = sand.u32 %s77, 1
        %s210 = smul.addr %s209, 2
        %s211 = scalar_lea.vmem [#allocation7], %s210
        %p212 = pneg %p90
        %p213 = pneg %p87
        %p214 = pneg %p118
        %p215 = pneg %p115
        %s216 = sand.u32 %s105, 1
        %s217 = scalar_lea.sflag [#allocation6], %s216
        %s218 = sand.u32 %s105, 1
        %s219 = smul.addr %s218, 2
        %s220 = scalar_lea.vmem [#allocation9], %s219
        %s221 = sld [smem:[#allocation3 + %s31]]
        %v222 = vld [vmem:[%s186] sm:$0x3]
        %v223 = vld [vmem:[%s195] sm:$0x1]
        %v224 = vld [vmem:[%s195 + $0x1] sm:$0x1]
        %v225 = vlaneseq
        %v226 = vshrl.u32 %v225, 7
        %v227 = vsub.s32 0, %v226
        %v228 = vrot.slane %v223, %v227
        %v229 = vsub.f32 %v222, %v228
        %v230 = vlaneseq
        %v231 = vshrl.u32 %v230, 7
        %v232 = vsub.s32 0, %v231
        %v233 = vrot.slane %v224, %v232
        %v234 = vmul.f32 %v229, %v233
        %235 = vst [vmem:[%s220] sm:$0x3] %v234
        %s236 = sand.u32 %s105, 1
        %s237 = scalar_lea.sflag [#allocation6], %s236
        %s238 = sand.u32 %s105, 1
        %s239 = smul.addr %s238, 2
        %s240 = scalar_lea.vmem [#allocation9], %s239
        // Predicated region
        $region37: #{tpu_custom_call.1} parent=27 // pred_check
          %p241 = pneg %p115
        $region38: #{tpu_custom_call.1} parent=27 // pred_check_branch
          %243 = sbr.rel (%p241) target = $region40
        $region39: #{tpu_custom_call.1} parent=27 // pred_region
          %s245 = ssub.s32 32, 32
          %246 = vsyncadd %s237, %s245
          %s247 = sadd.s32 %s32, %s31
          %s248 = smul.addr %s247, 32
          %s249 = scalar_lea.hbm %s3, %s248
          %s251 = sshll.u32 %s240, 4
          %s252 = int_to_ptr.vmem [resolvable:$true] %s251
          %254 = dma.vmem_to_hbm [thread:$0]  %s252, 32, %s249, %s237
        $region40: #{tpu_custom_call.1} parent=27 // pred_fallthru
          _
      $region28: #{tpu_custom_call.1} parent=5 // pred_fallthru
        _
      %p255 = scmp.le.s32.totalorder 2, %s22
      // Predicated region
      $region41: #{tpu_custom_call.1} parent=5 // pred_check
        %p256 = pneg %p255
      $region42: #{tpu_custom_call.1} parent=5 // pred_check_branch
        %258 = sbr.rel (%p256) target = $region44
      $region43: #{tpu_custom_call.1} parent=5 // pred_region
        %s259 = ssub.s32 %s22, 2
        // Predicated region
        $region45: #{tpu_custom_call.1} parent=43 // pred_check
          %p260 = pneg %p121
        $region46: #{tpu_custom_call.1} parent=43 // pred_check_branch
          %262 = sbr.rel (%p260) target = $region48
        $region47: #{tpu_custom_call.1} parent=43 // pred_region
          %s263 = sand.u32 %s106, 1
          %s264 = scalar_lea.sflag [#allocation6], %s263
          %s265 = sand.u32 %s106, 1
          %s266 = smul.addr %s265, 2
          %s267 = scalar_lea.vmem [#allocation9], %s266
          %268 = dma.done %s264, 32
        $region48: #{tpu_custom_call.1} parent=43 // pred_fallthru
          _
      $region44: #{tpu_custom_call.1} parent=5 // pred_fallthru
        _
    $region6: #{tpu_custom_call.1} parent=1 // loop_footer
      %s26 = sadd.s32 1, %s22
    $region7: #{tpu_custom_call.1} parent=1 // loop_footer_branch
      %21 = sbr.rel target = $region3
    $region8: #{tpu_custom_call.1} parent=1 // loop_exit
      _
    %269 = vsyncpa [#allocation5], 1
    %s270 = scalar_lea.sflag [#allocation5], 1
    %271 = vsyncpa %s270, 1
    %272 = vsyncpa [#allocation8], 1
    %s273 = scalar_lea.sflag [#allocation8], 1
    %274 = vsyncpa %s273, 1
    %275 = vsyncpa [#allocation6], 1
    %s276 = scalar_lea.sflag [#allocation6], 1
    %277 = vsyncpa %s276, 1

</llo_original>
